<compile_context>
chip_gen: v7x
topology: tpu7x:2x2x1
jax: 0.10.0
libtpu: 0.0.40
codegen_flags: <defaults>
</compile_context>

<pallas_src>
import numpy as np
import jax
import jax.numpy as jnp
from jax.experimental import pallas as pl
from jax.experimental.pallas import tpu as pltpu


def _linear_interp_matrix(in_size, out_size):
    """(out_size, in_size) 1-D linear interpolation matrix, align_corners=True."""
    A = np.zeros((out_size, in_size), dtype=np.float32)
    for i in range(out_size):
        src = i * (in_size - 1) / (out_size - 1) if out_size > 1 else 0.0
        lo = min(max(int(np.floor(src)), 0), in_size - 1)
        hi = min(lo + 1, in_size - 1)
        f = float(src - lo)
        A[i, lo] += 1.0 - f
        A[i, hi] += f
    return A


def _choose_channel_block(nc, d, do):
    """Channels per grid step.

    Prefer the fewest grid steps that keep every matmul MXU-friendly:
      * one step (blocks == full array dims, always tile-legal) when the whole
        volume is small -- maximises the MXU M dimension, zero grid overhead;
      * otherwise the largest divisor B of N*C whose row blocks are 8-aligned,
        whose B*D rows land in a good MXU range, and whose kron(I_B, Ad)
        operator stays bounded (no wasted-FLOP blow-up on structural zeros).
    """
    if nc * d <= 512:           # small problem: single step is strictly best
        return nc
    for b in range(nc, 0, -1):
        if nc % b:
            continue
        if nc // b == 1:
            continue                         # handled by the fallback below
        if (b * d) % 8 or (b * do) % 8:
            continue                         # (8,128) row alignment
        if not (128 <= b * d <= 1024):
            continue                         # MXU-friendly M (and D-pass K)
        if b * b * d * do * 4 > (32 << 20):
            continue                         # cap kron(I_B, Ad) footprint
        return b
    return nc                                # G == 1 fallback: always legal


def _choose_ho_tile(h, w, ho, wo, itemsize, budget_bytes=24 << 20):
    """Column tile (in output rows `ho`) of the fused kron(Ah.T, Aw.T) operator.

    Full Ho when the operator fits the VMEM budget (single fetch, single
    buffer); otherwise the largest divisor of Ho whose column block stays
    lane-dense (THo*Wo % 128 == 0) and under budget.
    """
    if h * w * ho * wo * itemsize <= budget_bytes:
        return ho
    for t in range(ho - 1, 0, -1):
        if ho % t == 0 and (t * wo) % 128 == 0 and \
                h * w * t * wo * itemsize <= budget_bytes:
            return t
    # TODO(synk): extreme spatial sizes need a fully separable (Ah then Aw)
    # tiled pass; fall back to the dense operator and a larger VMEM limit.
    return ho


def _single_buffered_spec(block_shape, index_map):
    """BlockSpec for a constant-index operand: fetched once, so a single VMEM
    buffer halves its resident footprint.  Falls back to the default pipeline
    on older jax without `pipeline_mode` / `pl.Buffered`."""
    try:
        return pl.BlockSpec(block_shape, index_map, pipeline_mode=pl.Buffered(1))
    except (AttributeError, TypeError):
        return pl.BlockSpec(block_shape, index_map)


def _resample_kernel(ghw_ref, adk_ref, x_ref, o_ref):
    # ghw_ref: (H*W,  THo*Wo)  fused kron(Ah.T, Aw.T) column tile (compute dtype)
    # adk_ref: (B*Do, B*D)     kron(I_B, Ad), f32
    # x_ref:   (B*D,  H*W)     rows = (channel, d),  cols = (h, w)
    # o_ref:   (B*Do, THo*Wo)  rows = (channel, do), cols = (ho, wo)
    # Fused H/W pass on the MXU with f32 accumulation.
    t = jnp.dot(x_ref[...], ghw_ref[...], preferred_element_type=jnp.float32)
    # D pass stays in f32 (tiny matmul; avoids a second bf16 round-trip).
    o = jnp.dot(adk_ref[...], t, preferred_element_type=jnp.float32)
    o_ref[...] = o.astype(o_ref.dtype)


def output_layer(x, output_size):
    """Trilinear resize (align_corners=True) of an NCDHW tensor to output_size."""
    N, C, D, H, W = x.shape
    Do, Ho, Wo = output_size
    NC = N * C

    Ah = _linear_interp_matrix(H, Ho)   # (Ho, H)
    Aw = _linear_interp_matrix(W, Wo)   # (Wo, W)
    Ad = _linear_interp_matrix(D, Do)   # (Do, D)

    # bf16 inputs keep bf16 MXU operands for the big fused pass (f32 accumulate);
    # f32 inputs stay f32 end-to-end (matches the PyTorch reference closely).
    compute_dtype = jnp.bfloat16 if x.dtype == jnp.bfloat16 else jnp.float32
    op_itemsize = 2 if compute_dtype == jnp.bfloat16 else 4

    B = _choose_channel_block(NC, D, Do)
    G = NC // B
    THo = _choose_ho_tile(H, W, Ho, Wo, op_itemsize)
    n_tiles = Ho // THo

    # Fused in-plane operator: Ghw[(h,w),(ho,wo)] = Ah[ho,h] * Aw[wo,w].
    Ghw = np.kron(Ah.T, Aw.T)                                    # (H*W, Ho*Wo)
    # Depth operator lifted over the B channels of one grid step (stays f32).
    Adk = np.kron(np.eye(B, dtype=np.float32), Ad)               # (B*Do, B*D)

    ghw = jnp.asarray(Ghw, dtype=compute_dtype)
    adk = jnp.asarray(Adk, dtype=jnp.float32)
    # Free row-major views: rows = (n, c, d) / (n, c, do); cols = (h, w) / (ho, wo).
    x2 = x.reshape(NC * D, H * W)

    ghw_block = (H * W, THo * Wo)
    if n_tiles == 1:
        ghw_spec = _single_buffered_spec(ghw_block, lambda i, j: (0, 0))
    else:
        ghw_spec = pl.BlockSpec(ghw_block, lambda i, j: (0, j))
    adk_spec = _single_buffered_spec((B * Do, B * D), lambda i, j: (0, 0))
    x_spec = pl.BlockSpec((B * D, H * W), lambda i, j: (i, 0))
    out_spec = pl.BlockSpec((B * Do, THo * Wo), lambda i, j: (i, j))

    # Scoped-VMEM limit sized to the actual footprint (generous headroom),
    # never above v7x's 64 MiB physical VMEM.
    in_itemsize = x.dtype.itemsize
    footprint = (
        ghw_block[0] * ghw_block[1] * op_itemsize * (1 if n_tiles == 1 else 2)
        + (B * Do) * (B * D) * 4
        + (B * D) * (H * W) * in_itemsize * 2          # x double-buffer
        + (B * Do) * (THo * Wo) * in_itemsize * 2      # output double-buffer
        + (B * D) * (THo * Wo) * 4                     # f32 intermediate t
        + (B * Do) * (THo * Wo) * 4                    # f32 result before cast
    )
    vmem_limit = int(min(max(32 << 20, 2 * footprint), 64 << 20))

    out = pl.pallas_call(
        _resample_kernel,
        out_shape=jax.ShapeDtypeStruct((NC * Do, Ho * Wo), x.dtype),
        grid_spec=pltpu.PrefetchScalarGridSpec(
            num_scalar_prefetch=0,
            grid=(G, n_tiles),
            in_specs=[ghw_spec, adk_spec, x_spec],
            out_specs=out_spec,
        ),
        compiler_params=pltpu.CompilerParams(
            dimension_semantics=("parallel", "parallel"),
            vmem_limit_bytes=vmem_limit),
    )(ghw, adk, x2)

    return out.reshape(N, C, Do, Ho, Wo)


def _reference(x, output_size):
    """Pure-JAX reference: separable trilinear (align_corners=True) resize."""
    N, C, D, H, W = x.shape
    Do, Ho, Wo = output_size
    A_d = _linear_interp_matrix(D, Do)
    A_h = _linear_interp_matrix(H, Ho)
    A_w = _linear_interp_matrix(W, Wo)
    return jnp.einsum(
        'od,ph,qw,ncdhw->ncopq',
        A_d, A_h, A_w, x.astype(jnp.float32)).astype(x.dtype)


if __name__ == "__main__":
    key = jax.random.PRNGKey(0)
    x = jax.random.normal(key, (2, 3, 8, 16, 16), dtype=jnp.float32)  # N,C,D,H,W
    output_size = (12, 24, 32)                                        # Do,Ho,Wo

    y = output_layer(x, output_size)
    y = jax.block_until_ready(y)

    assert y.shape == (2, 3, 12, 24, 32), y.shape
    ref = _reference(x, output_size)
    np.testing.assert_allclose(np.asarray(y), np.asarray(ref), rtol=2e-2, atol=2e-2)

    print("KERNEL_OK")
</pallas_src>

<mosaic_0001>
module attributes {stable_mosaic.version = 11 : i64} {
  func.func @_resample_kernel(%arg0: i32, %arg1: i32, %arg2: memref<256x768xf32, #tpu.memory_space<vmem>>, %arg3: memref<72x48xf32, #tpu.memory_space<vmem>>, %arg4: memref<48x256xf32, #tpu.memory_space<vmem>>, %arg5: memref<72x768xf32, #tpu.memory_space<vmem>>) attributes {dimension_semantics = [#tpu.dimension_semantics<parallel>, #tpu.dimension_semantics<parallel>], iteration_bounds = array<i64: 1, 1>, scalar_prefetch = 0 : i64, scratch_operands = 0 : i64, tpu.core_type = #tpu.core_type<tc>, window_params = [{pipeline_mode = #tpu.pipeline_mode<synchronous>, transform_indices = @transform_0, window_bounds = array<i64: 256, 768>}, {pipeline_mode = #tpu.pipeline_mode<synchronous>, transform_indices = @transform_1, window_bounds = array<i64: 72, 48>}, {transform_indices = @transform_2, window_bounds = array<i64: 48, 256>}, {transform_indices = @transform_3, window_bounds = array<i64: 72, 768>}]} {
    %c0 = arith.constant 0 : index
    %c0_0 = arith.constant 0 : index
    %0 = vector.load %arg4[%c0, %c0_0] : memref<48x256xf32, #tpu.memory_space<vmem>>, vector<48x256xf32>
    %c0_1 = arith.constant 0 : index
    %c0_2 = arith.constant 0 : index
    %1 = vector.load %arg2[%c0_1, %c0_2] : memref<256x768xf32, #tpu.memory_space<vmem>>, vector<256x768xf32>
    %cst = arith.constant dense<0.000000e+00> : vector<48x768xf32>
    %2 = tpu.matmul %0, %1, %cst {dimension_numbers = #tpu.dot_dimension_numbers<[1], [0], [0], [1], [0, 0, 1, 1], [], []>} : vector<48x256xf32>, vector<256x768xf32>, vector<48x768xf32> -> vector<48x768xf32>
    %c0_3 = arith.constant 0 : index
    %c0_4 = arith.constant 0 : index
    %3 = vector.load %arg3[%c0_3, %c0_4] : memref<72x48xf32, #tpu.memory_space<vmem>>, vector<72x48xf32>
    %cst_5 = arith.constant dense<0.000000e+00> : vector<72x768xf32>
    %4 = tpu.matmul %3, %2, %cst_5 {dimension_numbers = #tpu.dot_dimension_numbers<[1], [0], [0], [1], [0, 0, 1, 1], [], []>} : vector<72x48xf32>, vector<48x768xf32>, vector<72x768xf32> -> vector<72x768xf32>
    %c0_6 = arith.constant 0 : index
    %c0_7 = arith.constant 0 : index
    %5 = vector.load %arg5[%c0_6, %c0_7] : memref<72x768xf32, #tpu.memory_space<vmem>>, vector<72x768xf32>
    tpu.vector_store %arg5[%c0_6, %c0_7], %4 {strides = array<i32>} : memref<72x768xf32, #tpu.memory_space<vmem>>, vector<72x768xf32>,
    return
  }
  func.func @transform_0(%arg0: i32, %arg1: i32) -> (i32, i32) {
    %c0_i32 = arith.constant 0 : i32
    %c0_i32_0 = arith.constant 0 : i32
    %c0_i32_1 = arith.constant 0 : i32
    return %c0_i32, %c0_i32_0 : i32, i32
  }
  func.func @transform_1(%arg0: i32, %arg1: i32) -> (i32, i32) {
    %c0_i32 = arith.constant 0 : i32
    %c0_i32_0 = arith.constant 0 : i32
    %c0_i32_1 = arith.constant 0 : i32
    return %c0_i32, %c0_i32_0 : i32, i32
  }
  func.func @transform_2(%arg0: i32, %arg1: i32) -> (i32, i32) {
    %c0_i32 = arith.constant 0 : i32
    %c0_i32_0 = arith.constant 0 : i32
    return %arg0, %c0_i32 : i32, i32
  }
  func.func @transform_3(%arg0: i32, %arg1: i32) -> (i32, i32) {
    %c0_i32 = arith.constant 0 : i32
    return %arg0, %arg1 : i32, i32
  }
}

</mosaic_0001>

<llo_original>
// kernel: tpu_custom_call.1
$region0: #{tpu_custom_call.1}
  #allocation0 [shape = 'u32[]', space=smem, size = 0x4, offset = 0x4, fixed_abs, tag = 'smem constant byte address 0x4 - core index']
  #allocation1 [shape = 'u32[144,128]{1,0:T(1,128)}', space=vmem, size = 0x12000, scoped, tag = 'internal scratch']
  %s0 = inlined_call_operand.hbm [shape: f32[256,768], index: 0, kind: input, shape index: {}]
  %s1 = inlined_call_operand.vmem [shape: f32[72,48], index: 1, kind: input, shape index: {}]
  %s2 = inlined_call_operand.vmem [shape: f32[48,256], index: 2, kind: input, shape index: {}]
  %s3 = inlined_call_operand.hbm [shape: f32[72,768], index: 3, kind: output, shape index: {}]
  %s4 = sld [smem:[#allocation0]]
  $region26: #{tpu_custom_call.1} parent=0
    _
  %s6 = ssub.s32 1, %s4
  %s7 = scalar_select 0, %s6, %s4
  $region1: #{tpu_custom_call.1} parent=0
    #allocation2 [shape = 'u8[786432]{0}', space=vmem, size = 0xc0000, scoped, tag = 'input window, operand 0, single buffered']
    #allocation3 [shape = 's32[1]{0}', space=sflag, size = 0x4, scoped, tag = 'scoped memory for tpu_custom_call.1']
    #allocation4 [shape = 's32[1]{0}', space=sflag, size = 0x4, scoped, tag = 'scoped memory for tpu_custom_call.1']
    #allocation5 [shape = 'u8[221184]{0}', space=vmem, size = 0x36000, scoped, tag = 'output window, operand 0, single buffered']
    %8 = vsyncpa [#allocation3], 0
    %9 = vsyncpa [#allocation4], 0
    // Predicated region
    $region2: #{tpu_custom_call.1} parent=1 // pred_check
      _
    $region3: #{tpu_custom_call.1} parent=1 // pred_check_branch
      %11 = sbr.rel (0) target = $region5
    $region4: #{tpu_custom_call.1} parent=1 // pred_region
      %s13 = ssub.s32 24576, 24576
      %14 = vsyncadd [#allocation3], %s13
      %s15 = sshll.u32 [#allocation2], 4
      %s16 = int_to_ptr.vmem [resolvable:$true] %s15
      %21 = dma.hbm_to_vmem [thread:$0]  %s0, 24576, %s16, [#allocation3], 768, 768, 48
    $region5: #{tpu_custom_call.1} parent=1 // pred_fallthru
      _
    // Predicated region
    $region6: #{tpu_custom_call.1} parent=1 // pred_check
      _
    $region7: #{tpu_custom_call.1} parent=1 // pred_check_branch
      %23 = sbr.rel (0) target = $region9
    $region8: #{tpu_custom_call.1} parent=1 // pred_region
      _
    $region9: #{tpu_custom_call.1} parent=1 // pred_fallthru
      _
    // Predicated region
    $region10: #{tpu_custom_call.1} parent=1 // pred_check
      _
    $region11: #{tpu_custom_call.1} parent=1 // pred_check_branch
      %25 = sbr.rel (0) target = $region13
    $region12: #{tpu_custom_call.1} parent=1 // pred_region
      _
    $region13: #{tpu_custom_call.1} parent=1 // pred_fallthru
      _
    // Predicated region
    $region14: #{tpu_custom_call.1} parent=1 // pred_check
      _
    $region15: #{tpu_custom_call.1} parent=1 // pred_check_branch
      %27 = sbr.rel (0) target = $region17
    $region16: #{tpu_custom_call.1} parent=1 // pred_region
      %28 = dma.done [#allocation3], 24576
    $region17: #{tpu_custom_call.1} parent=1 // pred_fallthru
      _
    %v29 = vld [vmem:[%s2] sm:$0xff]
    %v30 = vld [vmem:[%s2 + $0x8] sm:$0xff]
    %v31 = vld [vmem:[%s2 + $0x10] sm:$0xff]
    %v32 = vld [vmem:[%s2 + $0x18] sm:$0xff]
    %v33 = vld [vmem:[%s2 + $0x20] sm:$0xff]
    %v34 = vld [vmem:[%s2 + $0x28] sm:$0xff]
    %v35 = vld [vmem:[%s2 + $0x30] sm:$0xff]
    %v36 = vld [vmem:[%s2 + $0x38] sm:$0xff]
    %v37 = vld [vmem:[%s2 + $0x40] sm:$0xff]
    %v38 = vld [vmem:[%s2 + $0x48] sm:$0xff]
    %v39 = vld [vmem:[%s2 + $0x50] sm:$0xff]
    %v40 = vld [vmem:[%s2 + $0x58] sm:$0xff]
    %v41 = vld [vmem:[#allocation2] sm:$0xff]
    %v42 = vld [vmem:[#allocation2 + $0x8] sm:$0xff]
    %v43 = vld [vmem:[#allocation2 + $0x10] sm:$0xff]
    %v44 = vld [vmem:[#allocation2 + $0x18] sm:$0xff]
    %v45 = vld [vmem:[#allocation2 + $0x20] sm:$0xff]
    %v46 = vld [vmem:[#allocation2 + $0x28] sm:$0xff]
    %v47 = vld [vmem:[#allocation2 + $0x30] sm:$0xff]
    %v48 = vld [vmem:[#allocation2 + $0x38] sm:$0xff]
    %v49 = vld [vmem:[#allocation2 + $0x40] sm:$0xff]
    %v50 = vld [vmem:[#allocation2 + $0x48] sm:$0xff]
    %v51 = vld [vmem:[#allocation2 + $0x50] sm:$0xff]
    %v52 = vld [vmem:[#allocation2 + $0x58] sm:$0xff]
    %v53 = vld [vmem:[#allocation2 + $0x60] sm:$0xff]
    %v54 = vld [vmem:[#allocation2 + $0x68] sm:$0xff]
    %v55 = vld [vmem:[#allocation2 + $0x70] sm:$0xff]
    %v56 = vld [vmem:[#allocation2 + $0x78] sm:$0xff]
    %v57 = vld [vmem:[#allocation2 + $0x80] sm:$0xff]
    %v58 = vld [vmem:[#allocation2 + $0x88] sm:$0xff]
    %v59 = vld [vmem:[#allocation2 + $0x90] sm:$0xff]
    %v60 = vld [vmem:[#allocation2 + $0x98] sm:$0xff]
    %v61 = vld [vmem:[#allocation2 + $0xa0] sm:$0xff]
    %v62 = vld [vmem:[#allocation2 + $0xa8] sm:$0xff]
    %v63 = vld [vmem:[#allocation2 + $0xb0] sm:$0xff]
    %v64 = vld [vmem:[#allocation2 + $0xb8] sm:$0xff]
    %v65 = vld [vmem:[#allocation2 + $0xc0] sm:$0xff]
    %v66 = vld [vmem:[#allocation2 + $0xc8] sm:$0xff]
    %v67 = vld [vmem:[#allocation2 + $0xd0] sm:$0xff]
    %v68 = vld [vmem:[#allocation2 + $0xd8] sm:$0xff]
    %v69 = vld [vmem:[#allocation2 + $0xe0] sm:$0xff]
    %v70 = vld [vmem:[#allocation2 + $0xe8] sm:$0xff]
    %v71 = vld [vmem:[#allocation2 + $0xf0] sm:$0xff]
    %v72 = vld [vmem:[#allocation2 + $0xf8] sm:$0xff]
    %v73 = vld [vmem:[#allocation2 + $0x100] sm:$0xff]
    %v74 = vld [vmem:[#allocation2 + $0x108] sm:$0xff]
    %v75 = vld [vmem:[#allocation2 + $0x110] sm:$0xff]
    %v76 = vld [vmem:[#allocation2 + $0x118] sm:$0xff]
    %v77 = vld [vmem:[#allocation2 + $0x120] sm:$0xff]
    %v78 = vld [vmem:[#allocation2 + $0x128] sm:$0xff]
    %v79 = vld [vmem:[#allocation2 + $0x130] sm:$0xff]
    %v80 = vld [vmem:[#allocation2 + $0x138] sm:$0xff]
    %v81 = vld [vmem:[#allocation2 + $0x140] sm:$0xff]
    %v82 = vld [vmem:[#allocation2 + $0x148] sm:$0xff]
    %v83 = vld [vmem:[#allocation2 + $0x150] sm:$0xff]
    %v84 = vld [vmem:[#allocation2 + $0x158] sm:$0xff]
    %v85 = vld [vmem:[#allocation2 + $0x160] sm:$0xff]
    %v86 = vld [vmem:[#allocation2 + $0x168] sm:$0xff]
    %v87 = vld [vmem:[#allocation2 + $0x170] sm:$0xff]
    %v88 = vld [vmem:[#allocation2 + $0x178] sm:$0xff]
    %v89 = vld [vmem:[#allocation2 + $0x180] sm:$0xff]
    %v90 = vld [vmem:[#allocation2 + $0x188] sm:$0xff]
    %v91 = vld [vmem:[#allocation2 + $0x190] sm:$0xff]
    %v92 = vld [vmem:[#allocation2 + $0x198] sm:$0xff]
    %v93 = vld [vmem:[#allocation2 + $0x1a0] sm:$0xff]
    %v94 = vld [vmem:[#allocation2 + $0x1a8] sm:$0xff]
    %v95 = vld [vmem:[#allocation2 + $0x1b0] sm:$0xff]
    %v96 = vld [vmem:[#allocation2 + $0x1b8] sm:$0xff]
    %v97 = vld [vmem:[#allocation2 + $0x1c0] sm:$0xff]
    %v98 = vld [vmem:[#allocation2 + $0x1c8] sm:$0xff]
    %v99 = vld [vmem:[#allocation2 + $0x1d0] sm:$0xff]
    %v100 = vld [vmem:[#allocation2 + $0x1d8] sm:$0xff]
    %v101 = vld [vmem:[#allocation2 + $0x1e0] sm:$0xff]
    %v102 = vld [vmem:[#allocation2 + $0x1e8] sm:$0xff]
    %v103 = vld [vmem:[#allocation2 + $0x1f0] sm:$0xff]
    %v104 = vld [vmem:[#allocation2 + $0x1f8] sm:$0xff]
    %v105 = vld [vmem:[#allocation2 + $0x200] sm:$0xff]
    %v106 = vld [vmem:[#allocation2 + $0x208] sm:$0xff]
    %v107 = vld [vmem:[#allocation2 + $0x210] sm:$0xff]
    %v108 = vld [vmem:[#allocation2 + $0x218] sm:$0xff]
    %v109 = vld [vmem:[#allocation2 + $0x220] sm:$0xff]
    %v110 = vld [vmem:[#allocation2 + $0x228] sm:$0xff]
    %v111 = vld [vmem:[#allocation2 + $0x230] sm:$0xff]
    %v112 = vld [vmem:[#allocation2 + $0x238] sm:$0xff]
    %v113 = vld [vmem:[#allocation2 + $0x240] sm:$0xff]
    %v114 = vld [vmem:[#allocation2 + $0x248] sm:$0xff]
    %v115 = vld [vmem:[#allocation2 + $0x250] sm:$0xff]
    %v116 = vld [vmem:[#allocation2 + $0x258] sm:$0xff]
    %v117 = vld [vmem:[#allocation2 + $0x260] sm:$0xff]
    %v118 = vld [vmem:[#allocation2 + $0x268] sm:$0xff]
    %v119 = vld [vmem:[#allocation2 + $0x270] sm:$0xff]
    %v120 = vld [vmem:[#allocation2 + $0x278] sm:$0xff]
    %v121 = vld [vmem:[#allocation2 + $0x280] sm:$0xff]
    %v122 = vld [vmem:[#allocation2 + $0x288] sm:$0xff]
    %v123 = vld [vmem:[#allocation2 + $0x290] sm:$0xff]
    %v124 = vld [vmem:[#allocation2 + $0x298] sm:$0xff]
    %v125 = vld [vmem:[#allocation2 + $0x2a0] sm:$0xff]
    %v126 = vld [vmem:[#allocation2 + $0x2a8] sm:$0xff]
    %v127 = vld [vmem:[#allocation2 + $0x2b0] sm:$0xff]
    %v128 = vld [vmem:[#allocation2 + $0x2b8] sm:$0xff]
    %v129 = vld [vmem:[#allocation2 + $0x2c0] sm:$0xff]
    %v130 = vld [vmem:[#allocation2 + $0x2c8] sm:$0xff]
    %v131 = vld [vmem:[#allocation2 + $0x2d0] sm:$0xff]
    %v132 = vld [vmem:[#allocation2 + $0x2d8] sm:$0xff]
    %v133 = vld [vmem:[#allocation2 + $0x2e0] sm:$0xff]
    %v134 = vld [vmem:[#allocation2 + $0x2e8] sm:$0xff]
    %v135 = vld [vmem:[#allocation2 + $0x2f0] sm:$0xff]
    %v136 = vld [vmem:[#allocation2 + $0x2f8] sm:$0xff]
    %v137 = vld [vmem:[#allocation2 + $0x300] sm:$0xff]
    %v138 = vld [vmem:[#allocation2 + $0x308] sm:$0xff]
    %v139 = vld [vmem:[#allocation2 + $0x310] sm:$0xff]
    %v140 = vld [vmem:[#allocation2 + $0x318] sm:$0xff]
    %v141 = vld [vmem:[#allocation2 + $0x320] sm:$0xff]
    %v142 = vld [vmem:[#allocation2 + $0x328] sm:$0xff]
    %v143 = vld [vmem:[#allocation2 + $0x330] sm:$0xff]
    %v144 = vld [vmem:[#allocation2 + $0x338] sm:$0xff]
    %v145 = vld [vmem:[#allocation2 + $0x340] sm:$0xff]
    %v146 = vld [vmem:[#allocation2 + $0x348] sm:$0xff]
    %v147 = vld [vmem:[#allocation2 + $0x350] sm:$0xff]
    %v148 = vld [vmem:[#allocation2 + $0x358] sm:$0xff]
    %v149 = vld [vmem:[#allocation2 + $0x360] sm:$0xff]
    %v150 = vld [vmem:[#allocation2 + $0x368] sm:$0xff]
    %v151 = vld [vmem:[#allocation2 + $0x370] sm:$0xff]
    %v152 = vld [vmem:[#allocation2 + $0x378] sm:$0xff]
    %v153 = vld [vmem:[#allocation2 + $0x380] sm:$0xff]
    %v154 = vld [vmem:[#allocation2 + $0x388] sm:$0xff]
    %v155 = vld [vmem:[#allocation2 + $0x390] sm:$0xff]
    %v156 = vld [vmem:[#allocation2 + $0x398] sm:$0xff]
    %v157 = vld [vmem:[#allocation2 + $0x3a0] sm:$0xff]
    %v158 = vld [vmem:[#allocation2 + $0x3a8] sm:$0xff]
    %v159 = vld [vmem:[#allocation2 + $0x3b0] sm:$0xff]
    %v160 = vld [vmem:[#allocation2 + $0x3b8] sm:$0xff]
    %v161 = vld [vmem:[#allocation2 + $0x3c0] sm:$0xff]
    %v162 = vld [vmem:[#allocation2 + $0x3c8] sm:$0xff]
    %v163 = vld [vmem:[#allocation2 + $0x3d0] sm:$0xff]
    %v164 = vld [vmem:[#allocation2 + $0x3d8] sm:$0xff]
    %v165 = vld [vmem:[#allocation2 + $0x3e0] sm:$0xff]
    %v166 = vld [vmem:[#allocation2 + $0x3e8] sm:$0xff]
    %v167 = vld [vmem:[#allocation2 + $0x3f0] sm:$0xff]
    %v168 = vld [vmem:[#allocation2 + $0x3f8] sm:$0xff]
    %v169 = vld [vmem:[#allocation2 + $0x400] sm:$0xff]
    %v170 = vld [vmem:[#allocation2 + $0x408] sm:$0xff]
    %v171 = vld [vmem:[#allocation2 + $0x410] sm:$0xff]
    %v172 = vld [vmem:[#allocation2 + $0x418] sm:$0xff]
    %v173 = vld [vmem:[#allocation2 + $0x420] sm:$0xff]
    %v174 = vld [vmem:[#allocation2 + $0x428] sm:$0xff]
    %v175 = vld [vmem:[#allocation2 + $0x430] sm:$0xff]
    %v176 = vld [vmem:[#allocation2 + $0x438] sm:$0xff]
    %v177 = vld [vmem:[#allocation2 + $0x440] sm:$0xff]
    %v178 = vld [vmem:[#allocation2 + $0x448] sm:$0xff]
    %v179 = vld [vmem:[#allocation2 + $0x450] sm:$0xff]
    %v180 = vld [vmem:[#allocation2 + $0x458] sm:$0xff]
    %v181 = vld [vmem:[#allocation2 + $0x460] sm:$0xff]
    %v182 = vld [vmem:[#allocation2 + $0x468] sm:$0xff]
    %v183 = vld [vmem:[#allocation2 + $0x470] sm:$0xff]
    %v184 = vld [vmem:[#allocation2 + $0x478] sm:$0xff]
    %v185 = vld [vmem:[#allocation2 + $0x480] sm:$0xff]
    %v186 = vld [vmem:[#allocation2 + $0x488] sm:$0xff]
    %v187 = vld [vmem:[#allocation2 + $0x490] sm:$0xff]
    %v188 = vld [vmem:[#allocation2 + $0x498] sm:$0xff]
    %v189 = vld [vmem:[#allocation2 + $0x4a0] sm:$0xff]
    %v190 = vld [vmem:[#allocation2 + $0x4a8] sm:$0xff]
    %v191 = vld [vmem:[#allocation2 + $0x4b0] sm:$0xff]
    %v192 = vld [vmem:[#allocation2 + $0x4b8] sm:$0xff]
    %v193 = vld [vmem:[#allocation2 + $0x4c0] sm:$0xff]
    %v194 = vld [vmem:[#allocation2 + $0x4c8] sm:$0xff]
    %v195 = vld [vmem:[#allocation2 + $0x4d0] sm:$0xff]
    %v196 = vld [vmem:[#allocation2 + $0x4d8] sm:$0xff]
    %v197 = vld [vmem:[#allocation2 + $0x4e0] sm:$0xff]
    %v198 = vld [vmem:[#allocation2 + $0x4e8] sm:$0xff]
    %v199 = vld [vmem:[#allocation2 + $0x4f0] sm:$0xff]
    %v200 = vld [vmem:[#allocation2 + $0x4f8] sm:$0xff]
    %v201 = vld [vmem:[#allocation2 + $0x500] sm:$0xff]
    %v202 = vld [vmem:[#allocation2 + $0x508] sm:$0xff]
    %v203 = vld [vmem:[#allocation2 + $0x510] sm:$0xff]
    %v204 = vld [vmem:[#allocation2 + $0x518] sm:$0xff]
    %v205 = vld [vmem:[#allocation2 + $0x520] sm:$0xff]
    %v206 = vld [vmem:[#allocation2 + $0x528] sm:$0xff]
    %v207 = vld [vmem:[#allocation2 + $0x530] sm:$0xff]
    %v208 = vld [vmem:[#allocation2 + $0x538] sm:$0xff]
    %v209 = vld [vmem:[#allocation2 + $0x540] sm:$0xff]
    %v210 = vld [vmem:[#allocation2 + $0x548] sm:$0xff]
    %v211 = vld [vmem:[#allocation2 + $0x550] sm:$0xff]
    %v212 = vld [vmem:[#allocation2 + $0x558] sm:$0xff]
    %v213 = vld [vmem:[#allocation2 + $0x560] sm:$0xff]
    %v214 = vld [vmem:[#allocation2 + $0x568] sm:$0xff]
    %v215 = vld [vmem:[#allocation2 + $0x570] sm:$0xff]
    %v216 = vld [vmem:[#allocation2 + $0x578] sm:$0xff]
    %v217 = vld [vmem:[#allocation2 + $0x580] sm:$0xff]
    %v218 = vld [vmem:[#allocation2 + $0x588] sm:$0xff]
    %v219 = vld [vmem:[#allocation2 + $0x590] sm:$0xff]
    %v220 = vld [vmem:[#allocation2 + $0x598] sm:$0xff]
    %v221 = vld [vmem:[#allocation2 + $0x5a0] sm:$0xff]
    %v222 = vld [vmem:[#allocation2 + $0x5a8] sm:$0xff]
    %v223 = vld [vmem:[#allocation2 + $0x5b0] sm:$0xff]
    %v224 = vld [vmem:[#allocation2 + $0x5b8] sm:$0xff]
    %v225 = vld [vmem:[#allocation2 + $0x5c0] sm:$0xff]
    %v226 = vld [vmem:[#allocation2 + $0x5c8] sm:$0xff]
    %v227 = vld [vmem:[#allocation2 + $0x5d0] sm:$0xff]
    %v228 = vld [vmem:[#allocation2 + $0x5d8] sm:$0xff]
    %v229 = vld [vmem:[#allocation2 + $0x5e0] sm:$0xff]
    %v230 = vld [vmem:[#allocation2 + $0x5e8] sm:$0xff]
    %v231 = vld [vmem:[#allocation2 + $0x5f0] sm:$0xff]
    %v232 = vld [vmem:[#allocation2 + $0x5f8] sm:$0xff]
    %233 = vmatprep.subr.mxu0 %v42
    %234 = vmatpush1.msra.mxu0 %v41
    %235 = vmatprep.subr.mxu0 %v48
    %236 = vmatpush1.msra.mxu0 %v47
    %237 = vmatprep.subr.mxu0 %v54
    %238 = vmatpush1.msra.mxu0 %v53
    %239 = vmatprep.subr.mxu0 %v60
    %240 = vmatpush1.msra.mxu0 %v59
    %241 = vmatprep.subr.mxu0 %v66
    %242 = vmatpush1.msra.mxu0 %v65
    %243 = vmatprep.subr.mxu0 %v72
    %244 = vmatpush1.msra.mxu0 %v71
    %245 = vmatprep.subr.mxu0 %v78
    %246 = vmatpush1.msra.mxu0 %v77
    %247 = vmatprep.subr.mxu0 %v84
    %248 = vmatpush1.msra.mxu0 %v83
    %249 = vmatprep.subr.mxu0 %v90
    %250 = vmatpush1.msra.mxu0 %v89
    %251 = vmatprep.subr.mxu0 %v96
    %252 = vmatpush1.msra.mxu0 %v95
    %253 = vmatprep.subr.mxu0 %v102
    %254 = vmatpush1.msra.mxu0 %v101
    %255 = vmatprep.subr.mxu0 %v108
    %256 = vmatpush1.msra.mxu0 %v107
    %257 = vmatprep.subr.mxu0 %v114
    %258 = vmatpush1.msra.mxu0 %v113
    %259 = vmatprep.subr.mxu0 %v120
    %260 = vmatpush1.msra.mxu0 %v119
    %261 = vmatprep.subr.mxu0 %v126
    %262 = vmatpush1.msra.mxu0 %v125
    %263 = vmatprep.subr.mxu0 %v132
    %264 = vmatpush1.msra.mxu0 %v131
    %265 = vmatprep.subr.mxu0 %v138
    %266 = vmatpush1.msra.mxu0 %v137
    %267 = vmatprep.subr.mxu0 %v144
    %268 = vmatpush1.msra.mxu0 %v143
    %269 = vmatprep.subr.mxu0 %v150
    %270 = vmatpush1.msra.mxu0 %v149
    %271 = vmatprep.subr.mxu0 %v156
    %272 = vmatpush1.msra.mxu0 %v155
    %273 = vmatprep.subr.mxu0 %v162
    %274 = vmatpush1.msra.mxu0 %v161
    %275 = vmatprep.subr.mxu0 %v168
    %276 = vmatpush1.msra.mxu0 %v167
    %277 = vmatprep.subr.mxu0 %v174
    %278 = vmatpush1.msra.mxu0 %v173
    %279 = vmatprep.subr.mxu0 %v180
    %280 = vmatpush1.msra.mxu0 %v179
    %281 = vmatprep.subr.mxu0 %v186
    %282 = vmatpush1.msra.mxu0 %v185
    %283 = vmatprep.subr.mxu0 %v192
    %284 = vmatpush1.msra.mxu0 %v191
    %285 = vmatprep.subr.mxu0 %v198
    %286 = vmatpush1.msra.mxu0 %v197
    %287 = vmatprep.subr.mxu0 %v204
    %288 = vmatpush1.msra.mxu0 %v203
    %289 = vmatprep.subr.mxu0 %v210
    %290 = vmatpush1.msra.mxu0 %v209
    %291 = vmatprep.subr.mxu0 %v216
    %292 = vmatpush1.msra.mxu0 %v215
    %293 = vmatprep.subr.mxu0 %v222
    %294 = vmatpush1.msra.mxu0 %v221
    %295 = vmatprep.subr.mxu0 %v228
    %296 = vmatpush1.msra.mxu0 %v227
    %297 = vmatprep.mubr.f32.mxu0 %v30
    %298 = vmatmul.mubr.f32.gmra.mrb[0].mxu0 %v29
    %v299 = vpop.f32.mrb[0].mxu0
    %v300 = vadd.f32 0.0, %v299
    %v301 = vpop.f32.mrb[0].mxu0
    %v302 = vadd.f32 0.0, %v301
    %303 = vmatprep.mubr.f32.mxu0 %v32
    %304 = vmatmul.mubr.f32.gmra.mrb[0].mxu0 %v31
    %v305 = vpop.f32.mrb[0].mxu0
    %v306 = vadd.f32 0.0, %v305
    %v307 = vpop.f32.mrb[0].mxu0
    %v308 = vadd.f32 0.0, %v307
    %309 = vmatprep.mubr.f32.mxu0 %v34
    %310 = vmatmul.mubr.f32.gmra.mrb[0].mxu0 %v33
    %v311 = vpop.f32.mrb[0].mxu0
    %v312 = vadd.f32 0.0, %v311
    %v313 = vpop.f32.mrb[0].mxu0
    %v314 = vadd.f32 0.0, %v313
    %315 = vmatprep.mubr.f32.mxu0 %v36
    %316 = vmatmul.mubr.f32.gmra.mrb[0].mxu0 %v35
    %v317 = vpop.f32.mrb[0].mxu0
    %v318 = vadd.f32 0.0, %v317
    %v319 = vpop.f32.mrb[0].mxu0
    %v320 = vadd.f32 0.0, %v319
    %321 = vmatprep.mubr.f32.mxu0 %v38
    %322 = vmatmul.mubr.f32.gmra.mrb[0].mxu0 %v37
    %v323 = vpop.f32.mrb[0].mxu0
    %v324 = vadd.f32 0.0, %v323
    %v325 = vpop.f32.mrb[0].mxu0
    %v326 = vadd.f32 0.0, %v325
    %327 = vmatprep.mubr.f32.mxu0 %v40
    %328 = vmatmul.mubr.f32.gmra.mrb[0].mxu0 %v39
    %v329 = vpop.f32.mrb[0].mxu0
    %v330 = vadd.f32 0.0, %v329
    %v331 = vpop.f32.mrb[0].mxu0
    %v332 = vadd.f32 0.0, %v331
    %333 = vdwg.mxu0
    %334 = vmatprep.subr.mxu0 %v44
    %335 = vmatpush1.msra.mxu0 %v43
    %336 = vmatprep.subr.mxu0 %v50
    %337 = vmatpush1.msra.mxu0 %v49
    %338 = vmatprep.subr.mxu0 %v56
    %339 = vmatpush1.msra.mxu0 %v55
    %340 = vmatprep.subr.mxu0 %v62
    %341 = vmatpush1.msra.mxu0 %v61
    %342 = vmatprep.subr.mxu0 %v68
    %343 = vmatpush1.msra.mxu0 %v67
    %344 = vmatprep.subr.mxu0 %v74
    %345 = vmatpush1.msra.mxu0 %v73
    %346 = vmatprep.subr.mxu0 %v80
    %347 = vmatpush1.msra.mxu0 %v79
    %348 = vmatprep.subr.mxu0 %v86
    %349 = vmatpush1.msra.mxu0 %v85
    %350 = vmatprep.subr.mxu0 %v92
    %351 = vmatpush1.msra.mxu0 %v91
    %352 = vmatprep.subr.mxu0 %v98
    %353 = vmatpush1.msra.mxu0 %v97
    %354 = vmatprep.subr.mxu0 %v104
    %355 = vmatpush1.msra.mxu0 %v103
    %356 = vmatprep.subr.mxu0 %v110
    %357 = vmatpush1.msra.mxu0 %v109
    %358 = vmatprep.subr.mxu0 %v116
    %359 = vmatpush1.msra.mxu0 %v115
    %360 = vmatprep.subr.mxu0 %v122
    %361 = vmatpush1.msra.mxu0 %v121
    %362 = vmatprep.subr.mxu0 %v128
    %363 = vmatpush1.msra.mxu0 %v127
    %364 = vmatprep.subr.mxu0 %v134
    %365 = vmatpush1.msra.mxu0 %v133
    %366 = vmatprep.subr.mxu0 %v140
    %367 = vmatpush1.msra.mxu0 %v139
    %368 = vmatprep.subr.mxu0 %v146
    %369 = vmatpush1.msra.mxu0 %v145
    %370 = vmatprep.subr.mxu0 %v152
    %371 = vmatpush1.msra.mxu0 %v151
    %372 = vmatprep.subr.mxu0 %v158
    %373 = vmatpush1.msra.mxu0 %v157
    %374 = vmatprep.subr.mxu0 %v164
    %375 = vmatpush1.msra.mxu0 %v163
    %376 = vmatprep.subr.mxu0 %v170
    %377 = vmatpush1.msra.mxu0 %v169
    %378 = vmatprep.subr.mxu0 %v176
    %379 = vmatpush1.msra.mxu0 %v175
    %380 = vmatprep.subr.mxu0 %v182
    %381 = vmatpush1.msra.mxu0 %v181
    %382 = vmatprep.subr.mxu0 %v188
    %383 = vmatpush1.msra.mxu0 %v187
    %384 = vmatprep.subr.mxu0 %v194
    %385 = vmatpush1.msra.mxu0 %v193
    %386 = vmatprep.subr.mxu0 %v200
    %387 = vmatpush1.msra.mxu0 %v199
    %388 = vmatprep.subr.mxu0 %v206
    %389 = vmatpush1.msra.mxu0 %v205
    %390 = vmatprep.subr.mxu0 %v212
    %391 = vmatpush1.msra.mxu0 %v211
    %392 = vmatprep.subr.mxu0 %v218
    %393 = vmatpush1.msra.mxu0 %v217
    %394 = vmatprep.subr.mxu0 %v224
    %395 = vmatpush1.msra.mxu0 %v223
    %396 = vmatprep.subr.mxu0 %v230
    %397 = vmatpush1.msra.mxu0 %v229
    %398 = vmatprep.mubr.f32.mxu0 %v30
    %399 = vmatmul.mubr.f32.gmra.mrb[0].mxu0 %v29
    %v400 = vpop.f32.mrb[0].mxu0
    %v401 = vadd.f32 0.0, %v400
    %v402 = vpop.f32.mrb[0].mxu0
    %v403 = vadd.f32 0.0, %v402
    %404 = vmatprep.mubr.f32.mxu0 %v32
    %405 = vmatmul.mubr.f32.gmra.mrb[0].mxu0 %v31
    %v406 = vpop.f32.mrb[0].mxu0
    %v407 = vadd.f32 0.0, %v406
    %v408 = vpop.f32.mrb[0].mxu0
    %v409 = vadd.f32 0.0, %v408
    %410 = vmatprep.mubr.f32.mxu0 %v34
    %411 = vmatmul.mubr.f32.gmra.mrb[0].mxu0 %v33
    %v412 = vpop.f32.mrb[0].mxu0
    %v413 = vadd.f32 0.0, %v412
    %v414 = vpop.f32.mrb[0].mxu0
    %v415 = vadd.f32 0.0, %v414
    %416 = vmatprep.mubr.f32.mxu0 %v36
    %417 = vmatmul.mubr.f32.gmra.mrb[0].mxu0 %v35
    %v418 = vpop.f32.mrb[0].mxu0
    %v419 = vadd.f32 0.0, %v418
    %v420 = vpop.f32.mrb[0].mxu0
    %v421 = vadd.f32 0.0, %v420
    %422 = vmatprep.mubr.f32.mxu0 %v38
    %423 = vmatmul.mubr.f32.gmra.mrb[0].mxu0 %v37
    %v424 = vpop.f32.mrb[0].mxu0
    %v425 = vadd.f32 0.0, %v424
    %v426 = vpop.f32.mrb[0].mxu0
    %v427 = vadd.f32 0.0, %v426
    %428 = vmatprep.mubr.f32.mxu0 %v40
    %429 = vmatmul.mubr.f32.gmra.mrb[0].mxu0 %v39
    %v430 = vpop.f32.mrb[0].mxu0
    %v431 = vadd.f32 0.0, %v430
    %v432 = vpop.f32.mrb[0].mxu0
    %v433 = vadd.f32 0.0, %v432
    %434 = vdwg.mxu0
    %435 = vmatprep.subr.mxu0 %v46
    %436 = vmatpush1.msra.mxu0 %v45
    %437 = vmatprep.subr.mxu0 %v52
    %438 = vmatpush1.msra.mxu0 %v51
    %439 = vmatprep.subr.mxu0 %v58
    %440 = vmatpush1.msra.mxu0 %v57
    %441 = vmatprep.subr.mxu0 %v64
    %442 = vmatpush1.msra.mxu0 %v63
    %443 = vmatprep.subr.mxu0 %v70
    %444 = vmatpush1.msra.mxu0 %v69
    %445 = vmatprep.subr.mxu0 %v76
    %446 = vmatpush1.msra.mxu0 %v75
    %447 = vmatprep.subr.mxu0 %v82
    %448 = vmatpush1.msra.mxu0 %v81
    %449 = vmatprep.subr.mxu0 %v88
    %450 = vmatpush1.msra.mxu0 %v87
    %451 = vmatprep.subr.mxu0 %v94
    %452 = vmatpush1.msra.mxu0 %v93
    %453 = vmatprep.subr.mxu0 %v100
    %454 = vmatpush1.msra.mxu0 %v99
    %455 = vmatprep.subr.mxu0 %v106
    %456 = vmatpush1.msra.mxu0 %v105
    %457 = vmatprep.subr.mxu0 %v112
    %458 = vmatpush1.msra.mxu0 %v111
    %459 = vmatprep.subr.mxu0 %v118
    %460 = vmatpush1.msra.mxu0 %v117
    %461 = vmatprep.subr.mxu0 %v124
    %462 = vmatpush1.msra.mxu0 %v123
    %463 = vmatprep.subr.mxu0 %v130
    %464 = vmatpush1.msra.mxu0 %v129
    %465 = vmatprep.subr.mxu0 %v136
    %466 = vmatpush1.msra.mxu0 %v135
    %467 = vmatprep.subr.mxu0 %v142
    %468 = vmatpush1.msra.mxu0 %v141
    %469 = vmatprep.subr.mxu0 %v148
    %470 = vmatpush1.msra.mxu0 %v147
    %471 = vmatprep.subr.mxu0 %v154
    %472 = vmatpush1.msra.mxu0 %v153
    %473 = vmatprep.subr.mxu0 %v160
    %474 = vmatpush1.msra.mxu0 %v159
    %475 = vmatprep.subr.mxu0 %v166
    %476 = vmatpush1.msra.mxu0 %v165
    %477 = vmatprep.subr.mxu0 %v172
    %478 = vmatpush1.msra.mxu0 %v171
    %479 = vmatprep.subr.mxu0 %v178
    %480 = vmatpush1.msra.mxu0 %v177
    %481 = vmatprep.subr.mxu0 %v184
    %482 = vmatpush1.msra.mxu0 %v183
    %483 = vmatprep.subr.mxu0 %v190
    %484 = vmatpush1.msra.mxu0 %v189
    %485 = vmatprep.subr.mxu0 %v196
    %486 = vmatpush1.msra.mxu0 %v195
    %487 = vmatprep.subr.mxu0 %v202
    %488 = vmatpush1.msra.mxu0 %v201
    %489 = vmatprep.subr.mxu0 %v208
    %490 = vmatpush1.msra.mxu0 %v207
    %491 = vmatprep.subr.mxu0 %v214
    %492 = vmatpush1.msra.mxu0 %v213
    %493 = vmatprep.subr.mxu0 %v220
    %494 = vmatpush1.msra.mxu0 %v219
    %495 = vmatprep.subr.mxu0 %v226
    %496 = vmatpush1.msra.mxu0 %v225
    %497 = vmatprep.subr.mxu0 %v232
    %498 = vmatpush1.msra.mxu0 %v231
    %499 = vmatprep.mubr.f32.mxu0 %v30
    %500 = vmatmul.mubr.f32.gmra.mrb[0].mxu0 %v29
    %v501 = vpop.f32.mrb[0].mxu0
    %v502 = vadd.f32 0.0, %v501
    %v503 = vpop.f32.mrb[0].mxu0
    %v504 = vadd.f32 0.0, %v503
    %505 = vmatprep.mubr.f32.mxu0 %v32
    %506 = vmatmul.mubr.f32.gmra.mrb[0].mxu0 %v31
    %v507 = vpop.f32.mrb[0].mxu0
    %v508 = vadd.f32 0.0, %v507
    %v509 = vpop.f32.mrb[0].mxu0
    %v510 = vadd.f32 0.0, %v509
    %511 = vmatprep.mubr.f32.mxu0 %v34
    %512 = vmatmul.mubr.f32.gmra.mrb[0].mxu0 %v33
    %v513 = vpop.f32.mrb[0].mxu0
    %v514 = vadd.f32 0.0, %v513
    %v515 = vpop.f32.mrb[0].mxu0
    %v516 = vadd.f32 0.0, %v515
    %517 = vmatprep.mubr.f32.mxu0 %v36
    %518 = vmatmul.mubr.f32.gmra.mrb[0].mxu0 %v35
    %v519 = vpop.f32.mrb[0].mxu0
    %v520 = vadd.f32 0.0, %v519
    %v521 = vpop.f32.mrb[0].mxu0
    %v522 = vadd.f32 0.0, %v521
    %523 = vmatprep.mubr.f32.mxu0 %v38
    %524 = vmatmul.mubr.f32.gmra.mrb[0].mxu0 %v37
    %v525 = vpop.f32.mrb[0].mxu0
    %v526 = vadd.f32 0.0, %v525
    %v527 = vpop.f32.mrb[0].mxu0
    %v528 = vadd.f32 0.0, %v527
    %529 = vmatprep.mubr.f32.mxu0 %v40
    %530 = vmatmul.mubr.f32.gmra.mrb[0].mxu0 %v39
    %v531 = vpop.f32.mrb[0].mxu0
    %v532 = vadd.f32 0.0, %v531
    %v533 = vpop.f32.mrb[0].mxu0
    %v534 = vadd.f32 0.0, %v533
    %535 = vdwg.mxu0
    %v536 = vld [vmem:[%s1] sm:$0xff]
    %v537 = vld [vmem:[%s1 + $0x8] sm:$0xff]
    %v538 = vld [vmem:[%s1 + $0x10] sm:$0xff]
    %v539 = vld [vmem:[%s1 + $0x18] sm:$0xff]
    %v540 = vld [vmem:[%s1 + $0x20] sm:$0xff]
    %v541 = vld [vmem:[%s1 + $0x28] sm:$0xff]
    %v542 = vld [vmem:[%s1 + $0x30] sm:$0xff]
    %v543 = vld [vmem:[%s1 + $0x38] sm:$0xff]
    %v544 = vld [vmem:[%s1 + $0x40] sm:$0xff]
    %vm545 = vcmask 392192
    %v547 = vsel %vm545, %v536, 0
    %v550 = vsel %vm545, %v537, 0
    %v553 = vsel %vm545, %v538, 0
    %v556 = vsel %vm545, %v539, 0
    %v559 = vsel %vm545, %v540, 0
    %v562 = vsel %vm545, %v541, 0
    %v565 = vsel %vm545, %v542, 0
    %v568 = vsel %vm545, %v543, 0
    %v571 = vsel %vm545, %v544, 0
    %573 = vmatprep.subr.mxu0 %v302
    %574 = vmatpush1.msra.mxu0 %v300
    %575 = vmatprep.subr.mxu0 %v308
    %576 = vmatpush1.msra.mxu0 %v306
    %577 = vmatprep.subr.mxu0 %v314
    %578 = vmatpush1.msra.mxu0 %v312
    %579 = vmatprep.subr.mxu0 %v320
    %580 = vmatpush1.msra.mxu0 %v318
    %581 = vmatprep.subr.mxu0 %v326
    %582 = vmatpush1.msra.mxu0 %v324
    %583 = vmatprep.subr.mxu0 %v332
    %584 = vmatpush1.msra.mxu0 %v330
    %585 = vmatprep.subr.mxu0 0.0
    %586 = vmatpush1.msra.mxu0 0.0
    %587 = vmatprep.subr.mxu0 0.0
    %588 = vmatpush1.msra.mxu0 0.0
    %589 = vmatprep.subr.mxu0 0.0
    %590 = vmatpush1.msra.mxu0 0.0
    %591 = vmatprep.subr.mxu0 0.0
    %592 = vmatpush1.msra.mxu0 0.0
    %593 = vmatprep.subr.mxu0 0.0
    %594 = vmatpush1.msra.mxu0 0.0
    %595 = vmatprep.subr.mxu0 0.0
    %596 = vmatpush1.msra.mxu0 0.0
    %597 = vmatprep.subr.mxu0 0.0
    %598 = vmatpush1.msra.mxu0 0.0
    %599 = vmatprep.subr.mxu0 0.0
    %600 = vmatpush1.msra.mxu0 0.0
    %601 = vmatprep.subr.mxu0 0.0
    %602 = vmatpush1.msra.mxu0 0.0
    %603 = vmatprep.subr.mxu0 0.0
    %604 = vmatpush1.msra.mxu0 0.0
    %605 = vmatprep.subr.mxu0 0.0
    %606 = vmatpush1.msra.mxu0 0.0
    %607 = vmatprep.subr.mxu0 0.0
    %608 = vmatpush1.msra.mxu0 0.0
    %609 = vmatprep.subr.mxu0 0.0
    %610 = vmatpush1.msra.mxu0 0.0
    %611 = vmatprep.subr.mxu0 0.0
    %612 = vmatpush1.msra.mxu0 0.0
    %613 = vmatprep.subr.mxu0 0.0
    %614 = vmatpush1.msra.mxu0 0.0
    %615 = vmatprep.subr.mxu0 0.0
    %616 = vmatpush1.msra.mxu0 0.0
    %617 = vmatprep.subr.mxu0 0.0
    %618 = vmatpush1.msra.mxu0 0.0
    %619 = vmatprep.subr.mxu0 0.0
    %620 = vmatpush1.msra.mxu0 0.0
    %621 = vmatprep.subr.mxu0 0.0
    %622 = vmatpush1.msra.mxu0 0.0
    %623 = vmatprep.subr.mxu0 0.0
    %624 = vmatpush1.msra.mxu0 0.0
    %625 = vmatprep.subr.mxu0 0.0
    %626 = vmatpush1.msra.mxu0 0.0
    %627 = vmatprep.subr.mxu0 0.0
    %628 = vmatpush1.msra.mxu0 0.0
    %629 = vmatprep.subr.mxu0 0.0
    %630 = vmatpush1.msra.mxu0 0.0
    %631 = vmatprep.subr.mxu0 0.0
    %632 = vmatpush1.msra.mxu0 0.0
    %633 = vmatprep.subr.mxu0 0.0
    %634 = vmatpush1.msra.mxu0 0.0
    %635 = vmatprep.subr.mxu0 0.0
    %636 = vmatpush1.msra.mxu0 0.0
    %637 = vmatprep.mubr.f32.mxu0 0.0
    %638 = vmatmul.mubr.f32.gmra.mrb[0].mxu0 %v547
    %v639 = vpop.f32.mrb[0].mxu0
    %v640 = vadd.f32 0.0, %v639
    %v641 = vpop.f32.mrb[0].mxu0
    %v642 = vadd.f32 0.0, %v641
    %643 = vmatprep.mubr.f32.mxu0 0.0
    %644 = vmatmul.mubr.f32.gmra.mrb[0].mxu0 %v550
    %v645 = vpop.f32.mrb[0].mxu0
    %v646 = vadd.f32 0.0, %v645
    %v647 = vpop.f32.mrb[0].mxu0
    %v648 = vadd.f32 0.0, %v647
    %649 = vmatprep.mubr.f32.mxu0 0.0
    %650 = vmatmul.mubr.f32.gmra.mrb[0].mxu0 %v553
    %v651 = vpop.f32.mrb[0].mxu0
    %v652 = vadd.f32 0.0, %v651
    %v653 = vpop.f32.mrb[0].mxu0
    %v654 = vadd.f32 0.0, %v653
    %655 = vmatprep.mubr.f32.mxu0 0.0
    %656 = vmatmul.mubr.f32.gmra.mrb[0].mxu0 %v556
    %v657 = vpop.f32.mrb[0].mxu0
    %v658 = vadd.f32 0.0, %v657
    %v659 = vpop.f32.mrb[0].mxu0
    %v660 = vadd.f32 0.0, %v659
    %661 = vmatprep.mubr.f32.mxu0 0.0
    %662 = vmatmul.mubr.f32.gmra.mrb[0].mxu0 %v559
    %v663 = vpop.f32.mrb[0].mxu0
    %v664 = vadd.f32 0.0, %v663
    %v665 = vpop.f32.mrb[0].mxu0
    %v666 = vadd.f32 0.0, %v665
    %667 = vmatprep.mubr.f32.mxu0 0.0
    %668 = vmatmul.mubr.f32.gmra.mrb[0].mxu0 %v562
    %v669 = vpop.f32.mrb[0].mxu0
    %v670 = vadd.f32 0.0, %v669
    %v671 = vpop.f32.mrb[0].mxu0
    %v672 = vadd.f32 0.0, %v671
    %673 = vmatprep.mubr.f32.mxu0 0.0
    %674 = vmatmul.mubr.f32.gmra.mrb[0].mxu0 %v565
    %v675 = vpop.f32.mrb[0].mxu0
    %v676 = vadd.f32 0.0, %v675
    %v677 = vpop.f32.mrb[0].mxu0
    %v678 = vadd.f32 0.0, %v677
    %679 = vmatprep.mubr.f32.mxu0 0.0
    %680 = vmatmul.mubr.f32.gmra.mrb[0].mxu0 %v568
    %v681 = vpop.f32.mrb[0].mxu0
    %v682 = vadd.f32 0.0, %v681
    %v683 = vpop.f32.mrb[0].mxu0
    %v684 = vadd.f32 0.0, %v683
    %685 = vmatprep.mubr.f32.mxu0 0.0
    %686 = vmatmul.mubr.f32.gmra.mrb[0].mxu0 %v571
    %v687 = vpop.f32.mrb[0].mxu0
    %v688 = vadd.f32 0.0, %v687
    %v689 = vpop.f32.mrb[0].mxu0
    %v690 = vadd.f32 0.0, %v689
    %691 = vdwg.mxu0
    %692 = vmatprep.subr.mxu0 %v403
    %693 = vmatpush1.msra.mxu0 %v401
    %694 = vmatprep.subr.mxu0 %v409
    %695 = vmatpush1.msra.mxu0 %v407
    %696 = vmatprep.subr.mxu0 %v415
    %697 = vmatpush1.msra.mxu0 %v413
    %698 = vmatprep.subr.mxu0 %v421
    %699 = vmatpush1.msra.mxu0 %v419
    %700 = vmatprep.subr.mxu0 %v427
    %701 = vmatpush1.msra.mxu0 %v425
    %702 = vmatprep.subr.mxu0 %v433
    %703 = vmatpush1.msra.mxu0 %v431
    %704 = vmatprep.subr.mxu0 0.0
    %705 = vmatpush1.msra.mxu0 0.0
    %706 = vmatprep.subr.mxu0 0.0
    %707 = vmatpush1.msra.mxu0 0.0
    %708 = vmatprep.subr.mxu0 0.0
    %709 = vmatpush1.msra.mxu0 0.0
    %710 = vmatprep.subr.mxu0 0.0
    %711 = vmatpush1.msra.mxu0 0.0
    %712 = vmatprep.subr.mxu0 0.0
    %713 = vmatpush1.msra.mxu0 0.0
    %714 = vmatprep.subr.mxu0 0.0
    %715 = vmatpush1.msra.mxu0 0.0
    %716 = vmatprep.subr.mxu0 0.0
    %717 = vmatpush1.msra.mxu0 0.0
    %718 = vmatprep.subr.mxu0 0.0
    %719 = vmatpush1.msra.mxu0 0.0
    %720 = vmatprep.subr.mxu0 0.0
    %721 = vmatpush1.msra.mxu0 0.0
    %722 = vmatprep.subr.mxu0 0.0
    %723 = vmatpush1.msra.mxu0 0.0
    %724 = vmatprep.subr.mxu0 0.0
    %725 = vmatpush1.msra.mxu0 0.0
    %726 = vmatprep.subr.mxu0 0.0
    %727 = vmatpush1.msra.mxu0 0.0
    %728 = vmatprep.subr.mxu0 0.0
    %729 = vmatpush1.msra.mxu0 0.0
    %730 = vmatprep.subr.mxu0 0.0
    %731 = vmatpush1.msra.mxu0 0.0
    %732 = vmatprep.subr.mxu0 0.0
    %733 = vmatpush1.msra.mxu0 0.0
    %734 = vmatprep.subr.mxu0 0.0
    %735 = vmatpush1.msra.mxu0 0.0
    %736 = vmatprep.subr.mxu0 0.0
    %737 = vmatpush1.msra.mxu0 0.0
    %738 = vmatprep.subr.mxu0 0.0
    %739 = vmatpush1.msra.mxu0 0.0
    %740 = vmatprep.subr.mxu0 0.0
    %741 = vmatpush1.msra.mxu0 0.0
    %742 = vmatprep.subr.mxu0 0.0
    %743 = vmatpush1.msra.mxu0 0.0
    %744 = vmatprep.subr.mxu0 0.0
    %745 = vmatpush1.msra.mxu0 0.0
    %746 = vmatprep.subr.mxu0 0.0
    %747 = vmatpush1.msra.mxu0 0.0
    %748 = vmatprep.subr.mxu0 0.0
    %749 = vmatpush1.msra.mxu0 0.0
    %750 = vmatprep.subr.mxu0 0.0
    %751 = vmatpush1.msra.mxu0 0.0
    %752 = vmatprep.subr.mxu0 0.0
    %753 = vmatpush1.msra.mxu0 0.0
    %754 = vmatprep.subr.mxu0 0.0
    %755 = vmatpush1.msra.mxu0 0.0
    %756 = vmatprep.mubr.f32.mxu0 0.0
    %757 = vmatmul.mubr.f32.gmra.mrb[0].mxu0 %v547
    %v758 = vpop.f32.mrb[0].mxu0
    %v759 = vadd.f32 0.0, %v758
    %v760 = vpop.f32.mrb[0].mxu0
    %v761 = vadd.f32 0.0, %v760
    %762 = vmatprep.mubr.f32.mxu0 0.0
    %763 = vmatmul.mubr.f32.gmra.mrb[0].mxu0 %v550
    %v764 = vpop.f32.mrb[0].mxu0
    %v765 = vadd.f32 0.0, %v764
    %v766 = vpop.f32.mrb[0].mxu0
    %v767 = vadd.f32 0.0, %v766
    %768 = vmatprep.mubr.f32.mxu0 0.0
    %769 = vmatmul.mubr.f32.gmra.mrb[0].mxu0 %v553
    %v770 = vpop.f32.mrb[0].mxu0
    %v771 = vadd.f32 0.0, %v770
    %v772 = vpop.f32.mrb[0].mxu0
    %v773 = vadd.f32 0.0, %v772
    %774 = vmatprep.mubr.f32.mxu0 0.0
    %775 = vmatmul.mubr.f32.gmra.mrb[0].mxu0 %v556
    %v776 = vpop.f32.mrb[0].mxu0
    %v777 = vadd.f32 0.0, %v776
    %v778 = vpop.f32.mrb[0].mxu0
    %v779 = vadd.f32 0.0, %v778
    %780 = vmatprep.mubr.f32.mxu0 0.0
    %781 = vmatmul.mubr.f32.gmra.mrb[0].mxu0 %v559
    %v782 = vpop.f32.mrb[0].mxu0
    %v783 = vadd.f32 0.0, %v782
    %v784 = vpop.f32.mrb[0].mxu0
    %v785 = vadd.f32 0.0, %v784
    %786 = vmatprep.mubr.f32.mxu0 0.0
    %787 = vmatmul.mubr.f32.gmra.mrb[0].mxu0 %v562
    %v788 = vpop.f32.mrb[0].mxu0
    %v789 = vadd.f32 0.0, %v788
    %v790 = vpop.f32.mrb[0].mxu0
    %v791 = vadd.f32 0.0, %v790
    %792 = vmatprep.mubr.f32.mxu0 0.0
    %793 = vmatmul.mubr.f32.gmra.mrb[0].mxu0 %v565
    %v794 = vpop.f32.mrb[0].mxu0
    %v795 = vadd.f32 0.0, %v794
    %v796 = vpop.f32.mrb[0].mxu0
    %v797 = vadd.f32 0.0, %v796
    %798 = vmatprep.mubr.f32.mxu0 0.0
    %799 = vmatmul.mubr.f32.gmra.mrb[0].mxu0 %v568
    %v800 = vpop.f32.mrb[0].mxu0
    %v801 = vadd.f32 0.0, %v800
    %v802 = vpop.f32.mrb[0].mxu0
    %v803 = vadd.f32 0.0, %v802
    %804 = vmatprep.mubr.f32.mxu0 0.0
    %805 = vmatmul.mubr.f32.gmra.mrb[0].mxu0 %v571
    %v806 = vpop.f32.mrb[0].mxu0
    %v807 = vadd.f32 0.0, %v806
    %v808 = vpop.f32.mrb[0].mxu0
    %v809 = vadd.f32 0.0, %v808
    %810 = vdwg.mxu0
    %811 = vmatprep.subr.mxu0 %v504
    %812 = vmatpush1.msra.mxu0 %v502
    %813 = vmatprep.subr.mxu0 %v510
    %814 = vmatpush1.msra.mxu0 %v508
    %815 = vmatprep.subr.mxu0 %v516
    %816 = vmatpush1.msra.mxu0 %v514
    %817 = vmatprep.subr.mxu0 %v522
    %818 = vmatpush1.msra.mxu0 %v520
    %819 = vmatprep.subr.mxu0 %v528
    %820 = vmatpush1.msra.mxu0 %v526
    %821 = vmatprep.subr.mxu0 %v534
    %822 = vmatpush1.msra.mxu0 %v532
    %823 = vmatprep.subr.mxu0 0.0
    %824 = vmatpush1.msra.mxu0 0.0
    %825 = vmatprep.subr.mxu0 0.0
    %826 = vmatpush1.msra.mxu0 0.0
    %827 = vmatprep.subr.mxu0 0.0
    %828 = vmatpush1.msra.mxu0 0.0
    %829 = vmatprep.subr.mxu0 0.0
    %830 = vmatpush1.msra.mxu0 0.0
    %831 = vmatprep.subr.mxu0 0.0
    %832 = vmatpush1.msra.mxu0 0.0
    %833 = vmatprep.subr.mxu0 0.0
    %834 = vmatpush1.msra.mxu0 0.0
    %835 = vmatprep.subr.mxu0 0.0
    %836 = vmatpush1.msra.mxu0 0.0
    %837 = vmatprep.subr.mxu0 0.0
    %838 = vmatpush1.msra.mxu0 0.0
    %839 = vmatprep.subr.mxu0 0.0
    %840 = vmatpush1.msra.mxu0 0.0
    %841 = vmatprep.subr.mxu0 0.0
    %842 = vmatpush1.msra.mxu0 0.0
    %843 = vmatprep.subr.mxu0 0.0
    %844 = vmatpush1.msra.mxu0 0.0
    %845 = vmatprep.subr.mxu0 0.0
    %846 = vmatpush1.msra.mxu0 0.0
    %847 = vmatprep.subr.mxu0 0.0
    %848 = vmatpush1.msra.mxu0 0.0
    %849 = vmatprep.subr.mxu0 0.0
    %850 = vmatpush1.msra.mxu0 0.0
    %851 = vmatprep.subr.mxu0 0.0
    %852 = vmatpush1.msra.mxu0 0.0
    %853 = vmatprep.subr.mxu0 0.0
    %854 = vmatpush1.msra.mxu0 0.0
    %855 = vmatprep.subr.mxu0 0.0
    %856 = vmatpush1.msra.mxu0 0.0
    %857 = vmatprep.subr.mxu0 0.0
    %858 = vmatpush1.msra.mxu0 0.0
    %859 = vmatprep.subr.mxu0 0.0
    %860 = vmatpush1.msra.mxu0 0.0
    %861 = vmatprep.subr.mxu0 0.0
    %862 = vmatpush1.msra.mxu0 0.0
    %863 = vmatprep.subr.mxu0 0.0
    %864 = vmatpush1.msra.mxu0 0.0
    %865 = vmatprep.subr.mxu0 0.0
    %866 = vmatpush1.msra.mxu0 0.0
    %867 = vmatprep.subr.mxu0 0.0
    %868 = vmatpush1.msra.mxu0 0.0
    %869 = vmatprep.subr.mxu0 0.0
    %870 = vmatpush1.msra.mxu0 0.0
    %871 = vmatprep.subr.mxu0 0.0
    %872 = vmatpush1.msra.mxu0 0.0
    %873 = vmatprep.subr.mxu0 0.0
    %874 = vmatpush1.msra.mxu0 0.0
    %875 = vmatprep.mubr.f32.mxu0 0.0
    %876 = vmatmul.mubr.f32.gmra.mrb[0].mxu0 %v547
    %v877 = vpop.f32.mrb[0].mxu0
    %v878 = vadd.f32 0.0, %v877
    %v879 = vpop.f32.mrb[0].mxu0
    %v880 = vadd.f32 0.0, %v879
    %881 = vmatprep.mubr.f32.mxu0 0.0
    %882 = vmatmul.mubr.f32.gmra.mrb[0].mxu0 %v550
    %v883 = vpop.f32.mrb[0].mxu0
    %v884 = vadd.f32 0.0, %v883
    %v885 = vpop.f32.mrb[0].mxu0
    %v886 = vadd.f32 0.0, %v885
    %887 = vmatprep.mubr.f32.mxu0 0.0
    %888 = vmatmul.mubr.f32.gmra.mrb[0].mxu0 %v553
    %v889 = vpop.f32.mrb[0].mxu0
    %v890 = vadd.f32 0.0, %v889
    %v891 = vpop.f32.mrb[0].mxu0
    %v892 = vadd.f32 0.0, %v891
    %893 = vmatprep.mubr.f32.mxu0 0.0
    %894 = vmatmul.mubr.f32.gmra.mrb[0].mxu0 %v556
    %v895 = vpop.f32.mrb[0].mxu0
    %v896 = vadd.f32 0.0, %v895
    %v897 = vpop.f32.mrb[0].mxu0
    %v898 = vadd.f32 0.0, %v897
    %899 = vmatprep.mubr.f32.mxu0 0.0
    %900 = vmatmul.mubr.f32.gmra.mrb[0].mxu0 %v559
    %v901 = vpop.f32.mrb[0].mxu0
    %v902 = vadd.f32 0.0, %v901
    %v903 = vpop.f32.mrb[0].mxu0
    %v904 = vadd.f32 0.0, %v903
    %905 = vmatprep.mubr.f32.mxu0 0.0
    %906 = vmatmul.mubr.f32.gmra.mrb[0].mxu0 %v562
    %v907 = vpop.f32.mrb[0].mxu0
    %v908 = vadd.f32 0.0, %v907
    %v909 = vpop.f32.mrb[0].mxu0
    %v910 = vadd.f32 0.0, %v909
    %911 = vmatprep.mubr.f32.mxu0 0.0
    %912 = vmatmul.mubr.f32.gmra.mrb[0].mxu0 %v565
    %v913 = vpop.f32.mrb[0].mxu0
    %v914 = vadd.f32 0.0, %v913
    %v915 = vpop.f32.mrb[0].mxu0
    %v916 = vadd.f32 0.0, %v915
    %917 = vmatprep.mubr.f32.mxu0 0.0
    %918 = vmatmul.mubr.f32.gmra.mrb[0].mxu0 %v568
    %v919 = vpop.f32.mrb[0].mxu0
    %v920 = vadd.f32 0.0, %v919
    %v921 = vpop.f32.mrb[0].mxu0
    %v922 = vadd.f32 0.0, %v921
    %923 = vmatprep.mubr.f32.mxu0 0.0
    %924 = vmatmul.mubr.f32.gmra.mrb[0].mxu0 %v571
    %v925 = vpop.f32.mrb[0].mxu0
    %v926 = vadd.f32 0.0, %v925
    %v927 = vpop.f32.mrb[0].mxu0
    %v928 = vadd.f32 0.0, %v927
    %929 = vdwg.mxu0
    %930 = vst [vmem:[#allocation5] sm:$0xff] %v640
    %931 = vst [vmem:[#allocation5 + $0x8] sm:$0xff] %v642
    %932 = vst [vmem:[#allocation5 + $0x10] sm:$0xff] %v759
    %933 = vst [vmem:[#allocation5 + $0x18] sm:$0xff] %v761
    %934 = vst [vmem:[#allocation5 + $0x20] sm:$0xff] %v878
    %935 = vst [vmem:[#allocation5 + $0x28] sm:$0xff] %v880
    %936 = vst [vmem:[#allocation5 + $0x30] sm:$0xff] %v646
    %937 = vst [vmem:[#allocation5 + $0x38] sm:$0xff] %v648
    %938 = vst [vmem:[#allocation5 + $0x40] sm:$0xff] %v765
    %939 = vst [vmem:[#allocation5 + $0x48] sm:$0xff] %v767
    %940 = vst [vmem:[#allocation5 + $0x50] sm:$0xff] %v884
    %941 = vst [vmem:[#allocation5 + $0x58] sm:$0xff] %v886
    %942 = vst [vmem:[#allocation5 + $0x60] sm:$0xff] %v652
    %943 = vst [vmem:[#allocation5 + $0x68] sm:$0xff] %v654
    %944 = vst [vmem:[#allocation5 + $0x70] sm:$0xff] %v771
    %945 = vst [vmem:[#allocation5 + $0x78] sm:$0xff] %v773
    %946 = vst [vmem:[#allocation5 + $0x80] sm:$0xff] %v890
    %947 = vst [vmem:[#allocation5 + $0x88] sm:$0xff] %v892
    %948 = vst [vmem:[#allocation5 + $0x90] sm:$0xff] %v658
    %949 = vst [vmem:[#allocation5 + $0x98] sm:$0xff] %v660
    %950 = vst [vmem:[#allocation5 + $0xa0] sm:$0xff] %v777
    %951 = vst [vmem:[#allocation5 + $0xa8] sm:$0xff] %v779
    %952 = vst [vmem:[#allocation5 + $0xb0] sm:$0xff] %v896
    %953 = vst [vmem:[#allocation5 + $0xb8] sm:$0xff] %v898
    %954 = vst [vmem:[#allocation5 + $0xc0] sm:$0xff] %v664
    %955 = vst [vmem:[#allocation5 + $0xc8] sm:$0xff] %v666
    %956 = vst [vmem:[#allocation5 + $0xd0] sm:$0xff] %v783
    %957 = vst [vmem:[#allocation5 + $0xd8] sm:$0xff] %v785
    %958 = vst [vmem:[#allocation5 + $0xe0] sm:$0xff] %v902
    %959 = vst [vmem:[#allocation5 + $0xe8] sm:$0xff] %v904
    %960 = vst [vmem:[#allocation5 + $0xf0] sm:$0xff] %v670
    %961 = vst [vmem:[#allocation5 + $0xf8] sm:$0xff] %v672
    %962 = vst [vmem:[#allocation5 + $0x100] sm:$0xff] %v789
    %963 = vst [vmem:[#allocation5 + $0x108] sm:$0xff] %v791
    %964 = vst [vmem:[#allocation5 + $0x110] sm:$0xff] %v908
    %965 = vst [vmem:[#allocation5 + $0x118] sm:$0xff] %v910
    %966 = vst [vmem:[#allocation5 + $0x120] sm:$0xff] %v676
    %967 = vst [vmem:[#allocation5 + $0x128] sm:$0xff] %v678
    %968 = vst [vmem:[#allocation5 + $0x130] sm:$0xff] %v795
    %969 = vst [vmem:[#allocation5 + $0x138] sm:$0xff] %v797
    %970 = vst [vmem:[#allocation5 + $0x140] sm:$0xff] %v914
    %971 = vst [vmem:[#allocation5 + $0x148] sm:$0xff] %v916
    %972 = vst [vmem:[#allocation5 + $0x150] sm:$0xff] %v682
    %973 = vst [vmem:[#allocation5 + $0x158] sm:$0xff] %v684
    %974 = vst [vmem:[#allocation5 + $0x160] sm:$0xff] %v801
    %975 = vst [vmem:[#allocation5 + $0x168] sm:$0xff] %v803
    %976 = vst [vmem:[#allocation5 + $0x170] sm:$0xff] %v920
    %977 = vst [vmem:[#allocation5 + $0x178] sm:$0xff] %v922
    %978 = vst [vmem:[#allocation5 + $0x180] sm:$0xff] %v688
    %979 = vst [vmem:[#allocation5 + $0x188] sm:$0xff] %v690
    %980 = vst [vmem:[#allocation5 + $0x190] sm:$0xff] %v807
    %981 = vst [vmem:[#allocation5 + $0x198] sm:$0xff] %v809
    %982 = vst [vmem:[#allocation5 + $0x1a0] sm:$0xff] %v926
    %983 = vst [vmem:[#allocation5 + $0x1a8] sm:$0xff] %v928
    // Predicated region
    $region18: #{tpu_custom_call.1} parent=1 // pred_check
      _
    $region19: #{tpu_custom_call.1} parent=1 // pred_check_branch
      %985 = sbr.rel (0) target = $region21
    $region20: #{tpu_custom_call.1} parent=1 // pred_region
      %s987 = ssub.s32 6912, 6912
      %988 = vsyncadd [#allocation4], %s987
      %s989 = sshll.u32 [#allocation5], 4
      %s990 = int_to_ptr.vmem [resolvable:$true] %s989
      %995 = dma.vmem_to_hbm [thread:$0]  %s990, 6912, %s3, [#allocation4], 768, 768, 48
    $region21: #{tpu_custom_call.1} parent=1 // pred_fallthru
      _
    // Predicated region
    $region22: #{tpu_custom_call.1} parent=1 // pred_check
      _
    $region23: #{tpu_custom_call.1} parent=1 // pred_check_branch
      %997 = sbr.rel (0) target = $region25
    $region24: #{tpu_custom_call.1} parent=1 // pred_region
      %998 = dma.done [#allocation4], 6912
    $region25: #{tpu_custom_call.1} parent=1 // pred_fallthru
      _
    %999 = vsyncpa [#allocation3], 1
    %1000 = vsyncpa [#allocation4], 1

</llo_original>
